<compile_context>
chip_gen: v6e
topology: v6e:2x2x1
jax: 0.10.0
libtpu: 0.0.40
codegen_flags: <defaults>
</compile_context>

<pallas_src>
import functools

import jax
import jax.numpy as jnp
from jax import lax
from jax.experimental import pallas as pl
from jax.experimental.pallas import tpu as pltpu

INPUT_DIM = 768
HIDDEN = 32
NUM_CLASSES = 2


def _round_up(x, m):
    return (x + m - 1) // m * m


# ---------------------------------------------------------------------------
# Stage 1: hoisted input projection  gates_x = x @ W_ih   (bias added later)
# ---------------------------------------------------------------------------
def input_proj_kernel(x_ref, w_ref, g_ref):
    # x_ref: (tm, D) f32 -> cast to bf16 in-kernel (saves an external cast pass)
    # w_ref: (D, 4H) bf16 (resident)   g_ref: (tm, 4H) bf16
    g_ref[...] = jnp.dot(
        x_ref[...].astype(jnp.bfloat16), w_ref[...],
        preferred_element_type=jnp.float32).astype(jnp.bfloat16)


def input_projection(x_flat, w_ih_bf16, tm):
    rows, D = x_flat.shape
    G = w_ih_bf16.shape[1]
    return pl.pallas_call(
        input_proj_kernel,
        out_shape=jax.ShapeDtypeStruct((rows, G), jnp.bfloat16),
        grid=(pl.cdiv(rows, tm),),
        in_specs=[
            pl.BlockSpec((tm, D), lambda i: (i, 0)),   # x rows: streamed/pipelined
            pl.BlockSpec((D, G), lambda i: (0, 0)),    # W_ih: VMEM resident
        ],
        out_specs=pl.BlockSpec((tm, G), lambda i: (i, 0)),
        compiler_params=pltpu.CompilerParams(
            dimension_semantics=("parallel",)),
    )(x_flat, w_ih_bf16)


# ---------------------------------------------------------------------------
# Stage 2: sequential LSTM recurrence over time blocks + classifier
# ---------------------------------------------------------------------------
def lstm_recurrence_kernel(maxlen_ref, len_ref, g_ref, w_hh_ref, b_ref,
                           w_cls_ref, b_cls_ref, out_ref, h_scr, c_scr, *, tt):
    # maxlen_ref: (1,) int32 SMEM (scalar prefetch)
    # len_ref: (Bp, 1) int32      g_ref: (Bp, tt, 4H) bf16 (this time block)
    # w_hh_ref: (H, 4H) f32       b_ref: (1, 4H) f32 (b_ih + b_hh)
    # w_cls_ref: (H, C) f32       b_cls_ref: (1, C) f32
    # out_ref: (Bp, C) f32        h_scr / c_scr: (Bp, H) f32 VMEM scratch
    tj = pl.program_id(0)
    n_tj = pl.num_programs(0)
    H = w_hh_ref.shape[0]
    t0 = tj * tt

    @pl.when(tj == 0)
    def _init():
        h_scr[...] = jnp.zeros_like(h_scr)
        c_scr[...] = jnp.zeros_like(c_scr)

    # Fully-padded trailing time blocks: compute skipped here, DMA skipped via
    # the clamped block index in the gates index_map.
    @pl.when(t0 < maxlen_ref[0])
    def _block():
        h = h_scr[...]
        c = c_scr[...]
        w_hh = w_hh_ref[...]
        bias = b_ref[...]
        lens = len_ref[...]
        for k in range(tt):  # static unroll; per-grid-step overhead amortized
            g_t = g_ref[:, k, :].astype(jnp.float32)          # (Bp, 4H)
            gates = g_t + bias + jnp.dot(
                h, w_hh, preferred_element_type=jnp.float32)
            i_g = jax.nn.sigmoid(gates[:, 0 * H:1 * H])
            f_g = jax.nn.sigmoid(gates[:, 1 * H:2 * H])
            g_g = jnp.tanh(gates[:, 2 * H:3 * H])
            o_g = jax.nn.sigmoid(gates[:, 3 * H:4 * H])
            c_new = f_g * c + i_g * g_g
            h_new = o_g * jnp.tanh(c_new)
            valid = lens > (t0 + k)                           # (Bp, 1) bool
            # NaN-safe freeze of state on padded steps (matches reference).
            h = jnp.where(valid, h_new, h)
            c = jnp.where(valid, c_new, c)
        h_scr[...] = h
        c_scr[...] = c

    @pl.when(tj == n_tj - 1)
    def _finalize():
        out_ref[...] = (
            jnp.dot(h_scr[...], w_cls_ref[...],
                    preferred_element_type=jnp.float32)
            + b_cls_ref[...])


def simple_lstm_forward(x, mask, params, *, row_tile=512, time_tile=32):
    """x: (B, T, 768) float32, mask: (B, T) {0,1}. Returns (B, num_classes)."""
    B, T, D = x.shape
    H = params["w_hh"].shape[0]
    G = 4 * H
    C = params["w_cls"].shape[1]

    # ---- Stage 1: one big bf16 MXU matmul over all B*T rows (batch-major) ----
    rows = B * T
    tm = min(row_tile, _round_up(rows, 8))          # memory-bound tile, all gens
    x_flat = x.reshape(rows, D)                     # metadata-only reshape, f32
    gates = input_projection(x_flat, params["w_ih"].astype(jnp.bfloat16), tm)
    gates = gates.reshape(B, T, G)                  # batch-major; NO transpose

    # ---- Stage 2 prep: lengths replace the padded mask; pad batch to 8 ----
    lengths = jnp.sum(mask.astype(jnp.int32), axis=1)          # (B,)
    len_2d = lengths.reshape(B, 1)
    Bp = _round_up(B, 8)
    if Bp != B:  # pad only the small gate tensor / lengths, never x
        gates = jnp.pad(gates, ((0, Bp - B), (0, 0), (0, 0)))
        len_2d = jnp.pad(len_2d, ((0, Bp - B), (0, 0)))
    maxlen = jnp.max(lengths).reshape(1).astype(jnp.int32)

    tt = min(time_tile, _round_up(T, 8))
    n_tb = pl.cdiv(T, tt)

    def gate_idx(tj, ml):
        # Clamp to the last block containing a valid timestep so fully-padded
        # trailing blocks repeat the previous index (no DMA re-fetch).
        last = jnp.maximum(ml[0] - 1, 0) // tt
        return (0, jnp.minimum(tj, last), 0)

    grid_spec = pltpu.PrefetchScalarGridSpec(
        num_scalar_prefetch=1,
        grid=(n_tb,),
        in_specs=[
            pl.BlockSpec((Bp, 1, ), lambda tj, ml: (0, 0)),    # lengths (resident)
            pl.BlockSpec((Bp, tt, G), gate_idx),               # gates (streamed)
            pl.BlockSpec((H, G), lambda tj, ml: (0, 0)),       # W_hh (resident)
            pl.BlockSpec((1, G), lambda tj, ml: (0, 0)),       # bias (resident)
            pl.BlockSpec((H, C), lambda tj, ml: (0, 0)),       # W_cls (resident)
            pl.BlockSpec((1, C), lambda tj, ml: (0, 0)),       # b_cls (resident)
        ],
        out_specs=pl.BlockSpec((Bp, C), lambda tj, ml: (0, 0)),
        scratch_shapes=[pltpu.VMEM((Bp, H), jnp.float32),      # h state
                        pltpu.VMEM((Bp, H), jnp.float32)],     # c state
    )
    out_p = pl.pallas_call(
        functools.partial(lstm_recurrence_kernel, tt=tt),
        out_shape=jax.ShapeDtypeStruct((Bp, C), jnp.float32),
        grid_spec=grid_spec,
        compiler_params=pltpu.CompilerParams(
            dimension_semantics=("arbitrary",)),
    )(maxlen, len_2d, gates, params["w_hh"], params["b"],
      params["w_cls"], params["b_cls"])
    return out_p[:B]


# ---------------------------------------------------------------------------
# Pure-JAX reference (same semantics), for verification.
# ---------------------------------------------------------------------------
def reference_forward(x, mask, params, *, bf16_gates=False):
    B, T, D = x.shape
    H = params["w_hh"].shape[0]

    if bf16_gates:  # mirror the kernel's bf16 matmul + bf16 gate storage
        gx = jnp.dot(x.astype(jnp.bfloat16), params["w_ih"].astype(jnp.bfloat16),
                     preferred_element_type=jnp.float32)
        gx = gx.astype(jnp.bfloat16).astype(jnp.float32)
    else:
        gx = jnp.dot(x, params["w_ih"], preferred_element_type=jnp.float32)
    gx = gx + params["b"]                                         # (B, T, 4H)

    def cell(carry, inp):
        h, c = carry
        g_t, m_t = inp
        gates = g_t + h @ params["w_hh"]
        i = jax.nn.sigmoid(gates[:, :H])
        f = jax.nn.sigmoid(gates[:, H:2 * H])
        g = jnp.tanh(gates[:, 2 * H:3 * H])
        o = jax.nn.sigmoid(gates[:, 3 * H:])
        c_new = f * c + i * g
        h_new = o * jnp.tanh(c_new)
        valid = m_t[:, None] > 0.5
        return (jnp.where(valid, h_new, h), jnp.where(valid, c_new, c)), None

    init = (jnp.zeros((B, H), jnp.float32), jnp.zeros((B, H), jnp.float32))
    xs = (jnp.transpose(gx, (1, 0, 2)), jnp.transpose(mask.astype(jnp.float32)))
    (h_final, _), _ = lax.scan(cell, init, xs)
    return h_final @ params["w_cls"] + params["b_cls"]


def init_params(key, input_dim=INPUT_DIM, hidden=HIDDEN, num_classes=NUM_CLASSES):
    """Deterministic init matching PyTorch LSTM/Linear shapes (transposed for x@W)."""
    ks = jax.random.split(key, 6)
    k_lstm = 1.0 / jnp.sqrt(hidden)
    k_cls = 1.0 / jnp.sqrt(hidden)
    w_ih = jax.random.uniform(ks[0], (input_dim, 4 * hidden), jnp.float32, -k_lstm, k_lstm)
    w_hh = jax.random.uniform(ks[1], (hidden, 4 * hidden), jnp.float32, -k_lstm, k_lstm)
    b_ih = jax.random.uniform(ks[2], (4 * hidden,), jnp.float32, -k_lstm, k_lstm)
    b_hh = jax.random.uniform(ks[3], (4 * hidden,), jnp.float32, -k_lstm, k_lstm)
    w_cls = jax.random.uniform(ks[4], (hidden, num_classes), jnp.float32, -k_cls, k_cls)
    b_cls = jax.random.uniform(ks[5], (num_classes,), jnp.float32, -k_cls, k_cls)
    return {
        "w_ih": w_ih,
        "w_hh": w_hh,
        "b": (b_ih + b_hh)[None, :],     # (1, 4H) — PyTorch adds both biases
        "w_cls": w_cls,
        "b_cls": b_cls[None, :],         # (1, C)
    }


if __name__ == "__main__":
    key = jax.random.PRNGKey(0)
    k_x, k_p = jax.random.split(key)

    B, T = 2, 8
    x = jax.random.normal(k_x, (B, T, INPUT_DIM), jnp.float32)
    # variable-length sequences (lengths 8 and 5), BERT-style prefix mask
    lengths = jnp.array([8, 5], dtype=jnp.int32)
    mask = (jnp.arange(T)[None, :] < lengths[:, None]).astype(jnp.int32)  # (B, T)

    params = init_params(k_p)

    out = jax.block_until_ready(simple_lstm_forward(x, mask, params))
    assert out.shape == (B, NUM_CLASSES)

    # strict check vs. a reference using the same bf16 projection + bf16 gates
    ref_bf16 = reference_forward(x, mask, params, bf16_gates=True)
    assert jnp.allclose(out, ref_bf16, atol=5e-3, rtol=5e-3), (out, ref_bf16)

    # looser check vs. full-f32 reference (documents bf16 quantization error only)
    ref_f32 = reference_forward(x, mask, params, bf16_gates=False)
    assert jnp.allclose(out, ref_f32, atol=5e-2, rtol=5e-2), (out, ref_f32)

    print("KERNEL_OK")
</pallas_src>

<mosaic_0001>
module attributes {stable_mosaic.version = 11 : i64} {
  func.func @input_proj_kernel(%arg0: i32, %arg1: memref<16x768xf32, #tpu.memory_space<vmem>>, %arg2: memref<768x128xbf16, #tpu.memory_space<vmem>>, %arg3: memref<16x128xbf16, #tpu.memory_space<vmem>>) attributes {dimension_semantics = [#tpu.dimension_semantics<parallel>], iteration_bounds = array<i64: 1>, scalar_prefetch = 0 : i64, scratch_operands = 0 : i64, tpu.core_type = #tpu.core_type<tc>, window_params = [{transform_indices = @transform_0, window_bounds = array<i64: 16, 768>}, {pipeline_mode = #tpu.pipeline_mode<synchronous>, transform_indices = @transform_1, window_bounds = array<i64: 768, 128>}, {transform_indices = @transform_2, window_bounds = array<i64: 16, 128>}]} {
    %c0 = arith.constant 0 : index
    %c0_0 = arith.constant 0 : index
    %0 = vector.load %arg1[%c0, %c0_0] : memref<16x768xf32, #tpu.memory_space<vmem>>, vector<16x768xf32>
    %1 = arith.truncf %0 : vector<16x768xf32> to vector<16x768xbf16>
    %c0_1 = arith.constant 0 : index
    %c0_2 = arith.constant 0 : index
    %2 = vector.load %arg2[%c0_1, %c0_2] : memref<768x128xbf16, #tpu.memory_space<vmem>>, vector<768x128xbf16>
    %cst = arith.constant dense<0.000000e+00> : vector<16x128xf32>
    %3 = tpu.matmul %1, %2, %cst {dimension_numbers = #tpu.dot_dimension_numbers<[1], [0], [0], [1], [0, 0, 1, 1], [], []>} : vector<16x768xbf16>, vector<768x128xbf16>, vector<16x128xf32> -> vector<16x128xf32>
    %4 = arith.truncf %3 : vector<16x128xf32> to vector<16x128xbf16>
    %c0_3 = arith.constant 0 : index
    %c0_4 = arith.constant 0 : index
    %5 = vector.load %arg3[%c0_3, %c0_4] : memref<16x128xbf16, #tpu.memory_space<vmem>>, vector<16x128xbf16>
    tpu.vector_store %arg3[%c0_3, %c0_4], %4 {strides = array<i32>} : memref<16x128xbf16, #tpu.memory_space<vmem>>, vector<16x128xbf16>,
    return
  }
  func.func @transform_0(%arg0: i32) -> (i32, i32) {
    %c0_i32 = arith.constant 0 : i32
    %c0_i32_0 = arith.constant 0 : i32
    return %arg0, %c0_i32 : i32, i32
  }
  func.func @transform_1(%arg0: i32) -> (i32, i32) {
    %c0_i32 = arith.constant 0 : i32
    %c0_i32_0 = arith.constant 0 : i32
    %c0_i32_1 = arith.constant 0 : i32
    return %c0_i32, %c0_i32_0 : i32, i32
  }
  func.func @transform_2(%arg0: i32) -> (i32, i32) {
    %c0_i32 = arith.constant 0 : i32
    %c0_i32_0 = arith.constant 0 : i32
    return %arg0, %c0_i32 : i32, i32
  }
}

</mosaic_0001>

<llo_original>
// kernel: tpu_custom_call.1
$region0: #{tpu_custom_call.1}
  #allocation0 [shape = 'u32[]', space=smem, size = 0x4, offset = 0x4, fixed_abs, tag = 'smem constant byte address 0x4 - core index']
  #allocation1 [shape = 'u32[144,128]{1,0:T(1,128)}', space=vmem, size = 0x12000, scoped, tag = 'internal scratch']
  %s0 = inlined_call_operand.hbm [shape: f32[16,768], index: 0, kind: input, shape index: {}]
  %s1 = inlined_call_operand.hbm [shape: bf16[768,128], index: 1, kind: input, shape index: {}]
  %s2 = inlined_call_operand.hbm [shape: bf16[16,128], index: 2, kind: output, shape index: {}]
  %s3 = sld [smem:[#allocation0]]
  $region26: #{tpu_custom_call.1} parent=0
    _
  %s5 = ssub.s32 1, %s3
  %s6 = scalar_select 0, %s5, %s3
  $region1: #{tpu_custom_call.1} parent=0
    #allocation2 [shape = 'u8[49152]{0}', space=vmem, size = 0xc000, scoped, tag = 'input window, operand 0, single buffered']
    #allocation3 [shape = 's32[1]{0}', space=sflag, size = 0x4, scoped, tag = 'scoped memory for tpu_custom_call.1']
    #allocation4 [shape = 's32[1]{0}', space=sflag, size = 0x4, scoped, tag = 'scoped memory for tpu_custom_call.1']
    #allocation5 [shape = 'u8[196608]{0}', space=vmem, size = 0x30000, scoped, tag = 'input window, operand 1, single buffered']
    #allocation6 [shape = 's32[1]{0}', space=sflag, size = 0x4, scoped, tag = 'scoped memory for tpu_custom_call.1']
    #allocation7 [shape = 'u8[4096]{0}', space=vmem, size = 0x1000, scoped, tag = 'output window, operand 0, single buffered']
    %7 = vsyncpa [#allocation3], 0
    %8 = vsyncpa [#allocation6], 0
    %9 = vsyncpa [#allocation4], 0
    // Predicated region
    $region2: #{tpu_custom_call.1} parent=1 // pred_check
      _
    $region3: #{tpu_custom_call.1} parent=1 // pred_check_branch
      %11 = sbr.rel (0) target = $region5
    $region4: #{tpu_custom_call.1} parent=1 // pred_region
      %s13 = ssub.s32 1536, 1536
      %14 = vsyncadd [#allocation3], %s13
      %s15 = sshll.u32 [#allocation2], 4
      %s16 = int_to_ptr.vmem [resolvable:$true] %s15
      %21 = dma.hbm_to_vmem [thread:$0]  %s0, 1536, %s16, [#allocation3], 768, 768, 48
    $region5: #{tpu_custom_call.1} parent=1 // pred_fallthru
      _
    // Predicated region
    $region6: #{tpu_custom_call.1} parent=1 // pred_check
      _
    $region7: #{tpu_custom_call.1} parent=1 // pred_check_branch
      %23 = sbr.rel (0) target = $region9
    $region8: #{tpu_custom_call.1} parent=1 // pred_region
      %s25 = ssub.s32 6144, 6144
      %26 = vsyncadd [#allocation6], %s25
      %s27 = sshll.u32 [#allocation5], 4
      %s28 = int_to_ptr.vmem [resolvable:$true] %s27
      %33 = dma.hbm_to_vmem [thread:$0]  %s1, 6144, %s28, [#allocation6], 64, 64, 4
    $region9: #{tpu_custom_call.1} parent=1 // pred_fallthru
      _
    // Predicated region
    $region10: #{tpu_custom_call.1} parent=1 // pred_check
      _
    $region11: #{tpu_custom_call.1} parent=1 // pred_check_branch
      %35 = sbr.rel (0) target = $region13
    $region12: #{tpu_custom_call.1} parent=1 // pred_region
      %36 = dma.done [#allocation3], 1536
    $region13: #{tpu_custom_call.1} parent=1 // pred_fallthru
      _
    // Predicated region
    $region14: #{tpu_custom_call.1} parent=1 // pred_check
      _
    $region15: #{tpu_custom_call.1} parent=1 // pred_check_branch
      %38 = sbr.rel (0) target = $region17
    $region16: #{tpu_custom_call.1} parent=1 // pred_region
      %39 = dma.done [#allocation6], 6144
    $region17: #{tpu_custom_call.1} parent=1 // pred_fallthru
      _
    %v41 = vld [vmem:[#allocation2] sm:$0xff]
    %v42 = vld [vmem:[#allocation2 + $0x8] sm:$0xff]
    %v43 = vld [vmem:[#allocation2 + $0x10] sm:$0xff]
    %v44 = vld [vmem:[#allocation2 + $0x18] sm:$0xff]
    %v45 = vld [vmem:[#allocation2 + $0x20] sm:$0xff]
    %v46 = vld [vmem:[#allocation2 + $0x28] sm:$0xff]
    %v47 = vld [vmem:[#allocation2 + $0x30] sm:$0xff]
    %v48 = vld [vmem:[#allocation2 + $0x38] sm:$0xff]
    %v49 = vld [vmem:[#allocation2 + $0x40] sm:$0xff]
    %v50 = vld [vmem:[#allocation2 + $0x48] sm:$0xff]
    %v51 = vld [vmem:[#allocation2 + $0x50] sm:$0xff]
    %v52 = vld [vmem:[#allocation2 + $0x58] sm:$0xff]
    %v53 = vpack.c.bf16 %v47, %v41
    %v54 = vpack.c.bf16 %v48, %v42
    %v55 = vpack.c.bf16 %v49, %v43
    %v56 = vpack.c.bf16 %v50, %v44
    %v57 = vpack.c.bf16 %v51, %v45
    %v58 = vpack.c.bf16 %v52, %v46
    %v59 = vld [vmem:[#allocation5] sm:$0xf]
    %v60 = vld [vmem:[#allocation5 + $0x4] sm:$0xf]
    %v61 = vld [vmem:[#allocation5 + $0x8] sm:$0xf]
    %v62 = vld [vmem:[#allocation5 + $0xc] sm:$0xf]
    %v63 = vld [vmem:[#allocation5 + $0x10] sm:$0xf]
    %v64 = vld [vmem:[#allocation5 + $0x14] sm:$0xf]
    %v65 = vld [vmem:[#allocation5 + $0x18] sm:$0xf]
    %v66 = vld [vmem:[#allocation5 + $0x1c] sm:$0xf]
    %v67 = vld [vmem:[#allocation5 + $0x20] sm:$0xf]
    %v68 = vld [vmem:[#allocation5 + $0x24] sm:$0xf]
    %v69 = vld [vmem:[#allocation5 + $0x28] sm:$0xf]
    %v70 = vld [vmem:[#allocation5 + $0x2c] sm:$0xf]
    %v71 = vld [vmem:[#allocation5 + $0x30] sm:$0xf]
    %v72 = vld [vmem:[#allocation5 + $0x34] sm:$0xf]
    %v73 = vld [vmem:[#allocation5 + $0x38] sm:$0xf]
    %v74 = vld [vmem:[#allocation5 + $0x3c] sm:$0xf]
    %v75 = vld [vmem:[#allocation5 + $0x40] sm:$0xf]
    %v76 = vld [vmem:[#allocation5 + $0x44] sm:$0xf]
    %v77 = vld [vmem:[#allocation5 + $0x48] sm:$0xf]
    %v78 = vld [vmem:[#allocation5 + $0x4c] sm:$0xf]
    %v79 = vld [vmem:[#allocation5 + $0x50] sm:$0xf]
    %v80 = vld [vmem:[#allocation5 + $0x54] sm:$0xf]
    %v81 = vld [vmem:[#allocation5 + $0x58] sm:$0xf]
    %v82 = vld [vmem:[#allocation5 + $0x5c] sm:$0xf]
    %v83 = vld [vmem:[#allocation5 + $0x60] sm:$0xf]
    %v84 = vld [vmem:[#allocation5 + $0x64] sm:$0xf]
    %v85 = vld [vmem:[#allocation5 + $0x68] sm:$0xf]
    %v86 = vld [vmem:[#allocation5 + $0x6c] sm:$0xf]
    %v87 = vld [vmem:[#allocation5 + $0x70] sm:$0xf]
    %v88 = vld [vmem:[#allocation5 + $0x74] sm:$0xf]
    %v89 = vld [vmem:[#allocation5 + $0x78] sm:$0xf]
    %v90 = vld [vmem:[#allocation5 + $0x7c] sm:$0xf]
    %v91 = vld [vmem:[#allocation5 + $0x80] sm:$0xf]
    %v92 = vld [vmem:[#allocation5 + $0x84] sm:$0xf]
    %v93 = vld [vmem:[#allocation5 + $0x88] sm:$0xf]
    %v94 = vld [vmem:[#allocation5 + $0x8c] sm:$0xf]
    %v95 = vld [vmem:[#allocation5 + $0x90] sm:$0xf]
    %v96 = vld [vmem:[#allocation5 + $0x94] sm:$0xf]
    %v97 = vld [vmem:[#allocation5 + $0x98] sm:$0xf]
    %v98 = vld [vmem:[#allocation5 + $0x9c] sm:$0xf]
    %v99 = vld [vmem:[#allocation5 + $0xa0] sm:$0xf]
    %v100 = vld [vmem:[#allocation5 + $0xa4] sm:$0xf]
    %v101 = vld [vmem:[#allocation5 + $0xa8] sm:$0xf]
    %v102 = vld [vmem:[#allocation5 + $0xac] sm:$0xf]
    %v103 = vld [vmem:[#allocation5 + $0xb0] sm:$0xf]
    %v104 = vld [vmem:[#allocation5 + $0xb4] sm:$0xf]
    %v105 = vld [vmem:[#allocation5 + $0xb8] sm:$0xf]
    %v106 = vld [vmem:[#allocation5 + $0xbc] sm:$0xf]
    %v107 = vld [vmem:[#allocation5 + $0xc0] sm:$0xf]
    %v108 = vld [vmem:[#allocation5 + $0xc4] sm:$0xf]
    %v109 = vld [vmem:[#allocation5 + $0xc8] sm:$0xf]
    %v110 = vld [vmem:[#allocation5 + $0xcc] sm:$0xf]
    %v111 = vld [vmem:[#allocation5 + $0xd0] sm:$0xf]
    %v112 = vld [vmem:[#allocation5 + $0xd4] sm:$0xf]
    %v113 = vld [vmem:[#allocation5 + $0xd8] sm:$0xf]
    %v114 = vld [vmem:[#allocation5 + $0xdc] sm:$0xf]
    %v115 = vld [vmem:[#allocation5 + $0xe0] sm:$0xf]
    %v116 = vld [vmem:[#allocation5 + $0xe4] sm:$0xf]
    %v117 = vld [vmem:[#allocation5 + $0xe8] sm:$0xf]
    %v118 = vld [vmem:[#allocation5 + $0xec] sm:$0xf]
    %v119 = vld [vmem:[#allocation5 + $0xf0] sm:$0xf]
    %v120 = vld [vmem:[#allocation5 + $0xf4] sm:$0xf]
    %v121 = vld [vmem:[#allocation5 + $0xf8] sm:$0xf]
    %v122 = vld [vmem:[#allocation5 + $0xfc] sm:$0xf]
    %v123 = vld [vmem:[#allocation5 + $0x100] sm:$0xf]
    %v124 = vld [vmem:[#allocation5 + $0x104] sm:$0xf]
    %v125 = vld [vmem:[#allocation5 + $0x108] sm:$0xf]
    %v126 = vld [vmem:[#allocation5 + $0x10c] sm:$0xf]
    %v127 = vld [vmem:[#allocation5 + $0x110] sm:$0xf]
    %v128 = vld [vmem:[#allocation5 + $0x114] sm:$0xf]
    %v129 = vld [vmem:[#allocation5 + $0x118] sm:$0xf]
    %v130 = vld [vmem:[#allocation5 + $0x11c] sm:$0xf]
    %v131 = vld [vmem:[#allocation5 + $0x120] sm:$0xf]
    %v132 = vld [vmem:[#allocation5 + $0x124] sm:$0xf]
    %v133 = vld [vmem:[#allocation5 + $0x128] sm:$0xf]
    %v134 = vld [vmem:[#allocation5 + $0x12c] sm:$0xf]
    %v135 = vld [vmem:[#allocation5 + $0x130] sm:$0xf]
    %v136 = vld [vmem:[#allocation5 + $0x134] sm:$0xf]
    %v137 = vld [vmem:[#allocation5 + $0x138] sm:$0xf]
    %v138 = vld [vmem:[#allocation5 + $0x13c] sm:$0xf]
    %v139 = vld [vmem:[#allocation5 + $0x140] sm:$0xf]
    %v140 = vld [vmem:[#allocation5 + $0x144] sm:$0xf]
    %v141 = vld [vmem:[#allocation5 + $0x148] sm:$0xf]
    %v142 = vld [vmem:[#allocation5 + $0x14c] sm:$0xf]
    %v143 = vld [vmem:[#allocation5 + $0x150] sm:$0xf]
    %v144 = vld [vmem:[#allocation5 + $0x154] sm:$0xf]
    %v145 = vld [vmem:[#allocation5 + $0x158] sm:$0xf]
    %v146 = vld [vmem:[#allocation5 + $0x15c] sm:$0xf]
    %v147 = vld [vmem:[#allocation5 + $0x160] sm:$0xf]
    %v148 = vld [vmem:[#allocation5 + $0x164] sm:$0xf]
    %v149 = vld [vmem:[#allocation5 + $0x168] sm:$0xf]
    %v150 = vld [vmem:[#allocation5 + $0x16c] sm:$0xf]
    %v151 = vld [vmem:[#allocation5 + $0x170] sm:$0xf]
    %v152 = vld [vmem:[#allocation5 + $0x174] sm:$0xf]
    %v153 = vld [vmem:[#allocation5 + $0x178] sm:$0xf]
    %v154 = vld [vmem:[#allocation5 + $0x17c] sm:$0xf]
    %v251 = vunpack.c.l.b16 %v59
    %v252 = vunpack.c.l.b16 %v60
    %v253 = vunpack.c.l.b16 %v61
    %v254 = vunpack.c.l.b16 %v62
    %v255 = vunpack.c.l.b16 %v63
    %v256 = vunpack.c.l.b16 %v64
    %v257 = vunpack.c.l.b16 %v65
    %v258 = vunpack.c.l.b16 %v66
    %v259 = vunpack.c.l.b16 %v67
    %v260 = vunpack.c.l.b16 %v68
    %v261 = vunpack.c.l.b16 %v69
    %v262 = vunpack.c.l.b16 %v70
    %v263 = vunpack.c.l.b16 %v71
    %v264 = vunpack.c.l.b16 %v72
    %v265 = vunpack.c.l.b16 %v73
    %v266 = vunpack.c.l.b16 %v74
    %v267 = vunpack.c.l.b16 %v75
    %v268 = vunpack.c.l.b16 %v76
    %v269 = vunpack.c.l.b16 %v77
    %v270 = vunpack.c.l.b16 %v78
    %v271 = vunpack.c.l.b16 %v79
    %v272 = vunpack.c.l.b16 %v80
    %v273 = vunpack.c.l.b16 %v81
    %v274 = vunpack.c.l.b16 %v82
    %v275 = vunpack.c.l.b16 %v83
    %v276 = vunpack.c.l.b16 %v84
    %v277 = vunpack.c.l.b16 %v85
    %v278 = vunpack.c.l.b16 %v86
    %v279 = vunpack.c.l.b16 %v87
    %v280 = vunpack.c.l.b16 %v88
    %v281 = vunpack.c.l.b16 %v89
    %v282 = vunpack.c.l.b16 %v90
    %v283 = vunpack.c.l.b16 %v91
    %v284 = vunpack.c.l.b16 %v92
    %v285 = vunpack.c.l.b16 %v93
    %v286 = vunpack.c.l.b16 %v94
    %v287 = vunpack.c.l.b16 %v95
    %v288 = vunpack.c.l.b16 %v96
    %v289 = vunpack.c.l.b16 %v97
    %v290 = vunpack.c.l.b16 %v98
    %v291 = vunpack.c.l.b16 %v99
    %v292 = vunpack.c.l.b16 %v100
    %v293 = vunpack.c.l.b16 %v101
    %v294 = vunpack.c.l.b16 %v102
    %v295 = vunpack.c.l.b16 %v103
    %v296 = vunpack.c.l.b16 %v104
    %v297 = vunpack.c.l.b16 %v105
    %v298 = vunpack.c.l.b16 %v106
    %v299 = vunpack.c.l.b16 %v107
    %v300 = vunpack.c.l.b16 %v108
    %v301 = vunpack.c.l.b16 %v109
    %v302 = vunpack.c.l.b16 %v110
    %v303 = vunpack.c.l.b16 %v111
    %v304 = vunpack.c.l.b16 %v112
    %v305 = vunpack.c.l.b16 %v113
    %v306 = vunpack.c.l.b16 %v114
    %v307 = vunpack.c.l.b16 %v115
    %v308 = vunpack.c.l.b16 %v116
    %v309 = vunpack.c.l.b16 %v117
    %v310 = vunpack.c.l.b16 %v118
    %v311 = vunpack.c.l.b16 %v119
    %v312 = vunpack.c.l.b16 %v120
    %v313 = vunpack.c.l.b16 %v121
    %v314 = vunpack.c.l.b16 %v122
    %v315 = vunpack.c.l.b16 %v123
    %v316 = vunpack.c.l.b16 %v124
    %v317 = vunpack.c.l.b16 %v125
    %v318 = vunpack.c.l.b16 %v126
    %v319 = vunpack.c.l.b16 %v127
    %v320 = vunpack.c.l.b16 %v128
    %v321 = vunpack.c.l.b16 %v129
    %v322 = vunpack.c.l.b16 %v130
    %v323 = vunpack.c.l.b16 %v131
    %v324 = vunpack.c.l.b16 %v132
    %v325 = vunpack.c.l.b16 %v133
    %v326 = vunpack.c.l.b16 %v134
    %v327 = vunpack.c.l.b16 %v135
    %v328 = vunpack.c.l.b16 %v136
    %v329 = vunpack.c.l.b16 %v137
    %v330 = vunpack.c.l.b16 %v138
    %v331 = vunpack.c.l.b16 %v139
    %v332 = vunpack.c.l.b16 %v140
    %v333 = vunpack.c.l.b16 %v141
    %v334 = vunpack.c.l.b16 %v142
    %v335 = vunpack.c.l.b16 %v143
    %v336 = vunpack.c.l.b16 %v144
    %v337 = vunpack.c.l.b16 %v145
    %v338 = vunpack.c.l.b16 %v146
    %v339 = vunpack.c.l.b16 %v147
    %v340 = vunpack.c.l.b16 %v148
    %v341 = vunpack.c.l.b16 %v149
    %v342 = vunpack.c.l.b16 %v150
    %v343 = vunpack.c.l.b16 %v151
    %v344 = vunpack.c.l.b16 %v152
    %v345 = vunpack.c.l.b16 %v153
    %v346 = vunpack.c.l.b16 %v154
    %v347 = vpack.c.b16 %v252, %v251
    %v348 = vpack.c.b16 %v254, %v253
    %v349 = vpack.c.b16 %v256, %v255
    %v350 = vpack.c.b16 %v258, %v257
    %v351 = vpack.c.b16 %v260, %v259
    %v352 = vpack.c.b16 %v262, %v261
    %v353 = vpack.c.b16 %v264, %v263
    %v354 = vpack.c.b16 %v266, %v265
    %v355 = vpack.c.b16 %v268, %v267
    %v356 = vpack.c.b16 %v270, %v269
    %v357 = vpack.c.b16 %v272, %v271
    %v358 = vpack.c.b16 %v274, %v273
    %v359 = vpack.c.b16 %v276, %v275
    %v360 = vpack.c.b16 %v278, %v277
    %v361 = vpack.c.b16 %v280, %v279
    %v362 = vpack.c.b16 %v282, %v281
    %v363 = vpack.c.b16 %v284, %v283
    %v364 = vpack.c.b16 %v286, %v285
    %v365 = vpack.c.b16 %v288, %v287
    %v366 = vpack.c.b16 %v290, %v289
    %v367 = vpack.c.b16 %v292, %v291
    %v368 = vpack.c.b16 %v294, %v293
    %v369 = vpack.c.b16 %v296, %v295
    %v370 = vpack.c.b16 %v298, %v297
    %v371 = vpack.c.b16 %v300, %v299
    %v372 = vpack.c.b16 %v302, %v301
    %v373 = vpack.c.b16 %v304, %v303
    %v374 = vpack.c.b16 %v306, %v305
    %v375 = vpack.c.b16 %v308, %v307
    %v376 = vpack.c.b16 %v310, %v309
    %v377 = vpack.c.b16 %v312, %v311
    %v378 = vpack.c.b16 %v314, %v313
    %v379 = vpack.c.b16 %v316, %v315
    %v380 = vpack.c.b16 %v318, %v317
    %v381 = vpack.c.b16 %v320, %v319
    %v382 = vpack.c.b16 %v322, %v321
    %v383 = vpack.c.b16 %v324, %v323
    %v384 = vpack.c.b16 %v326, %v325
    %v385 = vpack.c.b16 %v328, %v327
    %v386 = vpack.c.b16 %v330, %v329
    %v387 = vpack.c.b16 %v332, %v331
    %v388 = vpack.c.b16 %v334, %v333
    %v389 = vpack.c.b16 %v336, %v335
    %v390 = vpack.c.b16 %v338, %v337
    %v391 = vpack.c.b16 %v340, %v339
    %v392 = vpack.c.b16 %v342, %v341
    %v393 = vpack.c.b16 %v344, %v343
    %v394 = vpack.c.b16 %v346, %v345
    %443 = vmatprep.subr.bf16.mxu0 0
    %444 = vmatpush1.bf16.msra.mxu0 %v354
    %445 = vmatprep.subr.bf16.mxu0 0
    %446 = vmatpush1.bf16.msra.mxu0 %v353
    %447 = vmatprep.subr.bf16.mxu0 0
    %448 = vmatpush1.bf16.msra.mxu0 %v352
    %449 = vmatprep.subr.bf16.mxu0 0
    %450 = vmatpush1.bf16.msra.mxu0 %v351
    %451 = vmatprep.subr.bf16.mxu0 0
    %452 = vmatpush1.bf16.msra.mxu0 %v350
    %453 = vmatprep.subr.bf16.mxu0 0
    %454 = vmatpush1.bf16.msra.mxu0 %v349
    %455 = vmatprep.subr.bf16.mxu0 0
    %456 = vmatpush1.bf16.msra.mxu0 %v348
    %457 = vmatprep.subr.bf16.mxu0 0
    %458 = vmatpush1.bf16.msra.mxu0 %v347
    %459 = vmatprep.subr.bf16.mxu0 0
    %460 = vmatpush2.bf16.msra.mxu0 %v362
    %461 = vmatprep.subr.bf16.mxu0 0
    %462 = vmatpush2.bf16.msra.mxu0 %v361
    %463 = vmatprep.subr.bf16.mxu0 0
    %464 = vmatpush2.bf16.msra.mxu0 %v360
    %465 = vmatprep.subr.bf16.mxu0 0
    %466 = vmatpush2.bf16.msra.mxu0 %v359
    %467 = vmatprep.subr.bf16.mxu0 0
    %468 = vmatpush2.bf16.msra.mxu0 %v358
    %469 = vmatprep.subr.bf16.mxu0 0
    %470 = vmatpush2.bf16.msra.mxu0 %v357
    %471 = vmatprep.subr.bf16.mxu0 0
    %472 = vmatpush2.bf16.msra.mxu0 %v356
    %473 = vmatprep.subr.bf16.mxu0 0
    %474 = vmatpush2.bf16.msra.mxu0 %v355
    %475 = vmatprep.mubr.bf16.mxu0 %v54
    %476 = vmatmul.mubr.bf16.gmra.mxu0 %v53
    %v477 = vpop.f32.mrf.mxu0
    %v478 = vadd.f32 0.0, %v477
    %v479 = vpop.f32.mrf.mxu0
    %v480 = vpop.f32.mrf.mxu0
    %v481 = vadd.f32 0.0, %v480
    %v482 = vpop.f32.mrf.mxu0
    %483 = vdwg.mxu0
    %484 = vmatprep.subr.bf16.mxu0 0
    %485 = vmatpush1.bf16.msra.mxu0 %v370
    %486 = vmatprep.subr.bf16.mxu0 0
    %487 = vmatpush1.bf16.msra.mxu0 %v369
    %488 = vmatprep.subr.bf16.mxu0 0
    %489 = vmatpush1.bf16.msra.mxu0 %v368
    %490 = vmatprep.subr.bf16.mxu0 0
    %491 = vmatpush1.bf16.msra.mxu0 %v367
    %492 = vmatprep.subr.bf16.mxu0 0
    %493 = vmatpush1.bf16.msra.mxu0 %v366
    %494 = vmatprep.subr.bf16.mxu0 0
    %495 = vmatpush1.bf16.msra.mxu0 %v365
    %496 = vmatprep.subr.bf16.mxu0 0
    %497 = vmatpush1.bf16.msra.mxu0 %v364
    %498 = vmatprep.subr.bf16.mxu0 0
    %499 = vmatpush1.bf16.msra.mxu0 %v363
    %500 = vmatprep.subr.bf16.mxu0 0
    %501 = vmatpush2.bf16.msra.mxu0 %v378
    %502 = vmatprep.subr.bf16.mxu0 0
    %503 = vmatpush2.bf16.msra.mxu0 %v377
    %504 = vmatprep.subr.bf16.mxu0 0
    %505 = vmatpush2.bf16.msra.mxu0 %v376
    %506 = vmatprep.subr.bf16.mxu0 0
    %507 = vmatpush2.bf16.msra.mxu0 %v375
    %508 = vmatprep.subr.bf16.mxu0 0
    %509 = vmatpush2.bf16.msra.mxu0 %v374
    %510 = vmatprep.subr.bf16.mxu0 0
    %511 = vmatpush2.bf16.msra.mxu0 %v373
    %512 = vmatprep.subr.bf16.mxu0 0
    %513 = vmatpush2.bf16.msra.mxu0 %v372
    %514 = vmatprep.subr.bf16.mxu0 0
    %515 = vmatpush2.bf16.msra.mxu0 %v371
    %516 = vmatprep.mubr.bf16.mxu0 %v56
    %517 = vmatmul.mubr.bf16.gmra.mxu0 %v55
    %v518 = vpop.f32.mrf.mxu0
    %v519 = vadd.f32 %v478, %v518
    %v520 = vpop.f32.mrf.mxu0
    %v521 = vpop.f32.mrf.mxu0
    %v522 = vadd.f32 %v481, %v521
    %v523 = vpop.f32.mrf.mxu0
    %524 = vdwg.mxu0
    %525 = vmatprep.subr.bf16.mxu0 0
    %526 = vmatpush1.bf16.msra.mxu0 %v386
    %527 = vmatprep.subr.bf16.mxu0 0
    %528 = vmatpush1.bf16.msra.mxu0 %v385
    %529 = vmatprep.subr.bf16.mxu0 0
    %530 = vmatpush1.bf16.msra.mxu0 %v384
    %531 = vmatprep.subr.bf16.mxu0 0
    %532 = vmatpush1.bf16.msra.mxu0 %v383
    %533 = vmatprep.subr.bf16.mxu0 0
    %534 = vmatpush1.bf16.msra.mxu0 %v382
    %535 = vmatprep.subr.bf16.mxu0 0
    %536 = vmatpush1.bf16.msra.mxu0 %v381
    %537 = vmatprep.subr.bf16.mxu0 0
    %538 = vmatpush1.bf16.msra.mxu0 %v380
    %539 = vmatprep.subr.bf16.mxu0 0
    %540 = vmatpush1.bf16.msra.mxu0 %v379
    %541 = vmatprep.subr.bf16.mxu0 0
    %542 = vmatpush2.bf16.msra.mxu0 %v394
    %543 = vmatprep.subr.bf16.mxu0 0
    %544 = vmatpush2.bf16.msra.mxu0 %v393
    %545 = vmatprep.subr.bf16.mxu0 0
    %546 = vmatpush2.bf16.msra.mxu0 %v392
    %547 = vmatprep.subr.bf16.mxu0 0
    %548 = vmatpush2.bf16.msra.mxu0 %v391
    %549 = vmatprep.subr.bf16.mxu0 0
    %550 = vmatpush2.bf16.msra.mxu0 %v390
    %551 = vmatprep.subr.bf16.mxu0 0
    %552 = vmatpush2.bf16.msra.mxu0 %v389
    %553 = vmatprep.subr.bf16.mxu0 0
    %554 = vmatpush2.bf16.msra.mxu0 %v388
    %555 = vmatprep.subr.bf16.mxu0 0
    %556 = vmatpush2.bf16.msra.mxu0 %v387
    %557 = vmatprep.mubr.bf16.mxu0 %v58
    %558 = vmatmul.mubr.bf16.gmra.mxu0 %v57
    %v559 = vpop.f32.mrf.mxu0
    %v560 = vadd.f32 %v519, %v559
    %v561 = vpop.f32.mrf.mxu0
    %v562 = vpop.f32.mrf.mxu0
    %v563 = vadd.f32 %v522, %v562
    %v564 = vpop.f32.mrf.mxu0
    %565 = vdwg.mxu0
    %v566 = vpack.c.bf16 %v563, %v560
    %v568 = vunpack.c.l.b16 %v566
    %v569 = vunpack.c.h.b16 %v566
    %v570 = vpack.c.b16 %v568, %v568
    %v571 = vpack.c.b16 %v569, %v569
    %574 = vst [vmem:[#allocation7] sm:$0xf] %v570
    %575 = vst [vmem:[#allocation7 + $0x4] sm:$0xf] %v571
    // Predicated region
    $region18: #{tpu_custom_call.1} parent=1 // pred_check
      _
    $region19: #{tpu_custom_call.1} parent=1 // pred_check_branch
      %577 = sbr.rel (0) target = $region21
    $region20: #{tpu_custom_call.1} parent=1 // pred_region
      %s579 = ssub.s32 128, 128
      %580 = vsyncadd [#allocation4], %s579
      %s581 = sshll.u32 [#allocation7], 4
      %s582 = int_to_ptr.vmem [resolvable:$true] %s581
      %587 = dma.vmem_to_hbm [thread:$0]  %s582, 128, %s2, [#allocation4], 64, 64, 4
    $region21: #{tpu_custom_call.1} parent=1 // pred_fallthru
      _
    // Predicated region
    $region22: #{tpu_custom_call.1} parent=1 // pred_check
      _
    $region23: #{tpu_custom_call.1} parent=1 // pred_check_branch
      %589 = sbr.rel (0) target = $region25
    $region24: #{tpu_custom_call.1} parent=1 // pred_region
      %590 = dma.done [#allocation4], 128
    $region25: #{tpu_custom_call.1} parent=1 // pred_fallthru
      _
    %591 = vsyncpa [#allocation3], 1
    %592 = vsyncpa [#allocation6], 1
    %593 = vsyncpa [#allocation4], 1

</llo_original>
